<compile_context>
chip_gen: v6e
topology: v6e:2x2x1
jax: 0.10.0
libtpu: 0.0.40
codegen_flags: <defaults>
</compile_context>

<pallas_src>
import functools

import jax
import jax.numpy as jnp
from jax.experimental import pallas as pl
from jax.experimental.pallas import tpu as pltpu


_SQRT_2_OVER_PI = 0.7978845608028654
_GELU_C = 0.044715


def _gelu_tanh(x):
    # GELU, tanh approximation (matches torch.nn.GELU(approximate='tanh')).
    # Fused polynomial for the tanh argument: k * x * (1 + c*x^2).
    u = x * x
    t = jnp.tanh(_SQRT_2_OVER_PI * x * (1.0 + _GELU_C * u))
    return 0.5 * x * (1.0 + t)


def _mlp_kernel(x_ref, w1_ref, b1_ref, w2_ref, b2_ref, o_ref, acc_ref,
                *, nk, use_bf16):
    """Fused (x @ W1 + b1) -> gelu_tanh -> (@ W2 + b2), H-blocked.

    Grid: (M tiles, H blocks).  The H axis is a reduction for the second
    matmul; partial products accumulate into the f32 scratch `acc_ref`.

    x_ref : (TM, C)   input tile (native dtype)
    w1_ref: (C, TH)   fc-weight column block
    b1_ref: (1, TH)   fc-bias block
    w2_ref: (TH, C)   proj-weight row block
    b2_ref: (1, C)    proj bias (constant block)
    o_ref : (TM, C)   output tile
    acc_ref: (TM, C)  f32 accumulator scratch
    """
    k = pl.program_id(1)

    @pl.when(k == 0)
    def _init():
        acc_ref[...] = jnp.zeros_like(acc_ref)

    x = x_ref[...]
    w1 = w1_ref[...]
    w2 = w2_ref[...]
    if use_bf16:
        # bf16-fed MXU (v6e/v7x fast path); accumulation stays f32.
        x = x.astype(jnp.bfloat16)
        w1 = w1.astype(jnp.bfloat16)
        w2 = w2.astype(jnp.bfloat16)

    h = jnp.dot(x, w1, preferred_element_type=jnp.float32)
    h = h + b1_ref[...].astype(jnp.float32)
    if use_bf16:
        # Halve elementwise width for the gelu (bf16 VPU/EUP on v6e/v7x).
        h = h.astype(jnp.bfloat16)
    g = _gelu_tanh(h)

    acc_ref[...] += jnp.dot(g.astype(w2.dtype), w2,
                            preferred_element_type=jnp.float32)

    @pl.when(k == nk - 1)
    def _finalize():
        o_ref[...] = (acc_ref[...]
                      + b2_ref[...].astype(jnp.float32)).astype(o_ref.dtype)


def _round_up(n, m):
    return ((n + m - 1) // m) * m


def _vmem_limits():
    """(tile-chooser budget, vmem_limit_bytes) from the local chip's VMEM."""
    try:
        cap = int(pltpu.get_tpu_info().vmem_capacity_bytes)
    except Exception:
        cap = 64 * 1024 * 1024          # conservative (v7x-sized) fallback
    budget = int(cap * 0.75)            # headroom for Mosaic internal scratch
    limit = int(cap * 0.85)
    return budget, limit


def _footprint(tm, th, C, itemsize, use_bf16):
    """Approx VMEM bytes for one grid step (double-buffered I/O + weights)."""
    act_bytes = 2 if use_bf16 else 4
    x_io = 2 * tm * C * itemsize                       # x tile, 2 buffers
    o_io = 2 * tm * C * itemsize                       # out tile, 2 buffers
    wblk = 2 * (C * th + th * C + th + C) * itemsize   # W1/b1/W2/b2 blocks, 2 buffers
    acc = tm * C * 4                                   # f32 accumulator scratch
    hid = tm * th * (4 + act_bytes)                    # f32 matmul result + gelu temp
    return x_io + o_io + wblk + acc + hid


def _hidden_block_candidates(H):
    # Full H first, then multiples of 128 that divide H (largest first) so the
    # W1/W2 block shapes stay lane/sublane legal.
    cands = [H]
    cands += [d for d in range((H // 128) * 128, 127, -128)
              if d < H and H % d == 0]
    return cands


def _choose_tiles(M, C, H, itemsize, requested_tm, budget, use_bf16):
    """Pick (tm, th): rows per M tile and hidden-dim block width."""
    if M <= 256:
        tm = M                          # single full-dim block (always legal)
    else:
        tm = max(256, min(_round_up(requested_tm, 256), (M // 256) * 256))

    th_cands = _hidden_block_candidates(H)

    def fits(tm_, th_):
        return _footprint(tm_, th_, C, itemsize, use_bf16) <= budget

    while True:
        for th in th_cands:
            if fits(tm, th):
                return tm, th
        if tm <= 256:
            return tm, th_cands[-1]     # best effort
        tm = max(256, _round_up(tm // 2, 256))


def _legal_tile_h(tile_h, H):
    th = min(int(tile_h), H)
    if th == H:
        return H
    th = max(128, (th // 128) * 128)
    while H % th != 0:
        th -= 128
        if th < 128:
            return H
    return th


@functools.partial(jax.jit,
                   static_argnames=("tile_m", "tile_h", "use_bf16_matmul"))
def mlp_forward(xt, xc, w1, b1, w2, b2, *, tile_m=512, tile_h=None,
                use_bf16_matmul=False):
    """Pallas-fused MLP forward. Returns (mlp(xt), xc)."""
    B, T, C = xt.shape
    H = w1.shape[1]                     # 4*C
    M = B * T
    itemsize = jnp.dtype(xt.dtype).itemsize

    budget, vmem_limit = _vmem_limits()
    tm, th = _choose_tiles(M, C, H, itemsize, tile_m, budget, use_bf16_matmul)
    if tile_h is not None:              # explicit override (testing / tuning)
        th = _legal_tile_h(tile_h, H)
    nk = H // th
    n_m = pl.cdiv(M, tm)                # ragged boundary tile handled by Pallas

    x2d = xt.reshape(M, C)
    b1_2d = b1.reshape(1, H)
    b2_2d = b2.reshape(1, C)

    kernel = functools.partial(_mlp_kernel, nk=nk, use_bf16=use_bf16_matmul)

    w_bytes = (2 * C * H + H + C) * itemsize
    cost = pl.CostEstimate(
        flops=4 * M * C * H,            # two matmuls
        transcendentals=M * H,          # one tanh per hidden element
        bytes_accessed=2 * M * C * itemsize + w_bytes * (n_m if nk > 1 else 1),
    )

    out2d = pl.pallas_call(
        kernel,
        out_shape=jax.ShapeDtypeStruct((M, C), xt.dtype),
        grid_spec=pltpu.PrefetchScalarGridSpec(
            num_scalar_prefetch=0,
            grid=(n_m, nk),
            in_specs=[
                pl.BlockSpec((tm, C), lambda i, k: (i, 0)),   # x tile
                pl.BlockSpec((C, th), lambda i, k: (0, k)),   # W1 column block
                pl.BlockSpec((1, th), lambda i, k: (0, k)),   # b1 block
                pl.BlockSpec((th, C), lambda i, k: (k, 0)),   # W2 row block
                pl.BlockSpec((1, C), lambda i, k: (0, 0)),    # b2
            ],
            out_specs=pl.BlockSpec((tm, C), lambda i, k: (i, 0)),
            scratch_shapes=[pltpu.VMEM((tm, C), jnp.float32)],
        ),
        compiler_params=pltpu.CompilerParams(
            dimension_semantics=("parallel", "arbitrary"),
            vmem_limit_bytes=vmem_limit,
        ),
        cost_estimate=cost,
    )(x2d, w1, b1_2d, w2, b2_2d)

    return out2d.reshape(B, T, C), xc


def init_params(key, n_embd, dtype=jnp.float32):
    """Init mimicking torch.nn.Linear defaults (U[-1/sqrt(fan_in), 1/sqrt(fan_in)]).

    Weights stored as (in_features, out_features).
    """
    k1, k2, k3, k4 = jax.random.split(key, 4)
    hidden = 4 * n_embd
    bound1 = 1.0 / (n_embd ** 0.5)
    bound2 = 1.0 / (hidden ** 0.5)
    w1 = jax.random.uniform(k1, (n_embd, hidden), dtype, -bound1, bound1)
    b1 = jax.random.uniform(k2, (hidden,), dtype, -bound1, bound1)
    w2 = jax.random.uniform(k3, (hidden, n_embd), dtype, -bound2, bound2)
    b2 = jax.random.uniform(k4, (n_embd,), dtype, -bound2, bound2)
    return w1, b1, w2, b2


def mlp_reference(xt, w1, b1, w2, b2):
    hp = jax.lax.Precision.HIGHEST
    h = jnp.einsum("btc,ch->bth", xt, w1, precision=hp) + b1
    g = _gelu_tanh(h)
    return jnp.einsum("bth,hc->btc", g, w2, precision=hp) + b2


def _run_case(key, B, T, C, *, tile_h=None, use_bf16_matmul=False,
              atol=3e-2, rtol=3e-2):
    k_x, k_c, k_p = jax.random.split(key, 3)
    xt = jax.random.normal(k_x, (B, T, C), jnp.float32)
    xc = jax.random.normal(k_c, (B, T, C), jnp.float32)
    w1, b1, w2, b2 = init_params(k_p, C)

    out_t, out_c = mlp_forward(xt, xc, w1, b1, w2, b2,
                               tile_h=tile_h, use_bf16_matmul=use_bf16_matmul)
    jax.block_until_ready((out_t, out_c))

    ref_t = mlp_reference(xt, w1, b1, w2, b2)
    assert out_t.shape == (B, T, C) and out_t.dtype == xt.dtype
    max_err = float(jnp.max(jnp.abs(out_t - ref_t)))
    assert jnp.allclose(out_t, ref_t, atol=atol, rtol=rtol), f"max err {max_err}"
    assert jnp.array_equal(out_c, xc)      # xc must pass through untouched


if __name__ == "__main__":
    key = jax.random.PRNGKey(0)
    k1, k2, k3, k4 = jax.random.split(key, 4)

    # Small config: batch=2, seq=8, n_embd=128 (hidden=512); single M tile.
    _run_case(k1, B=2, T=8, C=128)

    # Non-tile-aligned M (2*200 = 400): ragged boundary block, 2 M-steps,
    # no XLA pad/slice on the activation path.
    _run_case(k2, B=2, T=200, C=128)

    # Force hidden-dim blocking (tile_h=128 -> 4 accumulation steps) to
    # exercise the streamed-weight / f32-accumulator path used for large C.
    _run_case(k3, B=2, T=8, C=128, tile_h=128)

    # bf16-fed MXU path (v6e/v7x fast path); looser tolerance vs f32 reference.
    _run_case(k4, B=2, T=8, C=128, use_bf16_matmul=True, atol=8e-2, rtol=8e-2)

    print("KERNEL_OK")
</pallas_src>

<mosaic_0001>
module attributes {stable_mosaic.version = 11 : i64} {
  func.func @_mlp_kernel(%arg0: i32, %arg1: i32, %arg2: memref<16x128xf32, #tpu.memory_space<vmem>>, %arg3: memref<128x512xf32, #tpu.memory_space<vmem>>, %arg4: memref<1x512xf32, #tpu.memory_space<vmem>>, %arg5: memref<512x128xf32, #tpu.memory_space<vmem>>, %arg6: memref<1x128xf32, #tpu.memory_space<vmem>>, %arg7: memref<16x128xf32, #tpu.memory_space<vmem>>, %arg8: memref<16x128xf32, #tpu.memory_space<vmem>>) attributes {dimension_semantics = [#tpu.dimension_semantics<parallel>, #tpu.dimension_semantics<arbitrary>], iteration_bounds = array<i64: 1, 1>, scalar_prefetch = 0 : i64, scratch_operands = 1 : i64, tpu.core_type = #tpu.core_type<tc>, window_params = [{transform_indices = @transform_0, window_bounds = array<i64: 16, 128>}, {transform_indices = @transform_1, window_bounds = array<i64: 128, 512>}, {transform_indices = @transform_2, window_bounds = array<i64: 1, 512>}, {transform_indices = @transform_3, window_bounds = array<i64: 512, 128>}, {pipeline_mode = #tpu.pipeline_mode<synchronous>, transform_indices = @transform_4, window_bounds = array<i64: 1, 128>}, {transform_indices = @transform_5, window_bounds = array<i64: 16, 128>}]} {
    %c0_i32 = arith.constant 0 : i32
    %0 = arith.cmpi eq, %arg1, %c0_i32 : i32
    %1 = arith.extui %0 : i1 to i32
    %c0_i32_0 = arith.constant 0 : i32
    %2 = arith.cmpi ne, %1, %c0_i32_0 : i32
    scf.if %2 {
      %cst_20 = arith.constant 0.000000e+00 : f32
      %31 = vector.broadcast %cst_20 : f32 to vector<16x128xf32>
      %c0_21 = arith.constant 0 : index
      %c0_22 = arith.constant 0 : index
      %32 = vector.load %arg8[%c0_21, %c0_22] : memref<16x128xf32, #tpu.memory_space<vmem>>, vector<16x128xf32>
      tpu.vector_store %arg8[%c0_21, %c0_22], %31 {strides = array<i32>} : memref<16x128xf32, #tpu.memory_space<vmem>>, vector<16x128xf32>,
    } else {
    }
    %c0 = arith.constant 0 : index
    %c0_1 = arith.constant 0 : index
    %3 = vector.load %arg2[%c0, %c0_1] : memref<16x128xf32, #tpu.memory_space<vmem>>, vector<16x128xf32>
    %c0_2 = arith.constant 0 : index
    %c0_3 = arith.constant 0 : index
    %4 = vector.load %arg3[%c0_2, %c0_3] : memref<128x512xf32, #tpu.memory_space<vmem>>, vector<128x512xf32>
    %c0_4 = arith.constant 0 : index
    %c0_5 = arith.constant 0 : index
    %5 = vector.load %arg5[%c0_4, %c0_5] : memref<512x128xf32, #tpu.memory_space<vmem>>, vector<512x128xf32>
    %cst = arith.constant dense<0.000000e+00> : vector<16x512xf32>
    %6 = tpu.matmul %3, %4, %cst {dimension_numbers = #tpu.dot_dimension_numbers<[1], [0], [0], [1], [0, 0, 1, 1], [], []>} : vector<16x128xf32>, vector<128x512xf32>, vector<16x512xf32> -> vector<16x512xf32>
    %c0_6 = arith.constant 0 : index
    %c0_7 = arith.constant 0 : index
    %7 = vector.load %arg4[%c0_6, %c0_7] : memref<1x512xf32, #tpu.memory_space<vmem>>, vector<1x512xf32>
    %8 = vector.broadcast %7 : vector<1x512xf32> to vector<16x512xf32>
    %9 = arith.addf %6, %8 : vector<16x512xf32>
    %10 = arith.mulf %9, %9 : vector<16x512xf32>
    %cst_8 = arith.constant 0.797884583 : f32
    %11 = vector.broadcast %cst_8 : f32 to vector<16x512xf32>
    %12 = arith.mulf %11, %9 : vector<16x512xf32>
    %cst_9 = arith.constant 4.471500e-02 : f32
    %13 = vector.broadcast %cst_9 : f32 to vector<16x512xf32>
    %14 = arith.mulf %13, %10 : vector<16x512xf32>
    %cst_10 = arith.constant 1.000000e+00 : f32
    %15 = vector.broadcast %cst_10 : f32 to vector<16x512xf32>
    %16 = arith.addf %15, %14 : vector<16x512xf32>
    %17 = arith.mulf %12, %16 : vector<16x512xf32>
    %18 = math.tanh %17 : vector<16x512xf32>
    %cst_11 = arith.constant 5.000000e-01 : f32
    %19 = vector.broadcast %cst_11 : f32 to vector<16x512xf32>
    %20 = arith.mulf %19, %9 : vector<16x512xf32>
    %cst_12 = arith.constant 1.000000e+00 : f32
    %21 = vector.broadcast %cst_12 : f32 to vector<16x512xf32>
    %22 = arith.addf %21, %18 : vector<16x512xf32>
    %23 = arith.mulf %20, %22 : vector<16x512xf32>
    %c0_13 = arith.constant 0 : index
    %c0_14 = arith.constant 0 : index
    %24 = vector.load %arg8[%c0_13, %c0_14] : memref<16x128xf32, #tpu.memory_space<vmem>>, vector<16x128xf32>
    %cst_15 = arith.constant dense<0.000000e+00> : vector<16x128xf32>
    %25 = tpu.matmul %23, %5, %cst_15 {dimension_numbers = #tpu.dot_dimension_numbers<[1], [0], [0], [1], [0, 0, 1, 1], [], []>} : vector<16x512xf32>, vector<512x128xf32>, vector<16x128xf32> -> vector<16x128xf32>
    %26 = arith.addf %24, %25 : vector<16x128xf32>
    %c0_16 = arith.constant 0 : index
    %c0_17 = arith.constant 0 : index
    %27 = vector.load %arg8[%c0_16, %c0_17] : memref<16x128xf32, #tpu.memory_space<vmem>>, vector<16x128xf32>
    tpu.vector_store %arg8[%c0_16, %c0_17], %26 {strides = array<i32>} : memref<16x128xf32, #tpu.memory_space<vmem>>, vector<16x128xf32>,
    %c0_i32_18 = arith.constant 0 : i32
    %28 = arith.cmpi eq, %arg1, %c0_i32_18 : i32
    %29 = arith.extui %28 : i1 to i32
    %c0_i32_19 = arith.constant 0 : i32
    %30 = arith.cmpi ne, %29, %c0_i32_19 : i32
    scf.if %30 {
      %c0_20 = arith.constant 0 : index
      %c0_21 = arith.constant 0 : index
      %31 = vector.load %arg8[%c0_20, %c0_21] : memref<16x128xf32, #tpu.memory_space<vmem>>, vector<16x128xf32>
      %c0_22 = arith.constant 0 : index
      %c0_23 = arith.constant 0 : index
      %32 = vector.load %arg6[%c0_22, %c0_23] : memref<1x128xf32, #tpu.memory_space<vmem>>, vector<1x128xf32>
      %33 = vector.broadcast %32 : vector<1x128xf32> to vector<16x128xf32>
      %34 = arith.addf %31, %33 : vector<16x128xf32>
      %c0_24 = arith.constant 0 : index
      %c0_25 = arith.constant 0 : index
      %35 = vector.load %arg7[%c0_24, %c0_25] : memref<16x128xf32, #tpu.memory_space<vmem>>, vector<16x128xf32>
      tpu.vector_store %arg7[%c0_24, %c0_25], %34 {strides = array<i32>} : memref<16x128xf32, #tpu.memory_space<vmem>>, vector<16x128xf32>,
    } else {
    }
    return
  }
  func.func @transform_0(%arg0: i32, %arg1: i32) -> (i32, i32) {
    %c0_i32 = arith.constant 0 : i32
    %c0_i32_0 = arith.constant 0 : i32
    return %arg0, %c0_i32 : i32, i32
  }
  func.func @transform_1(%arg0: i32, %arg1: i32) -> (i32, i32) {
    %c0_i32 = arith.constant 0 : i32
    %c0_i32_0 = arith.constant 0 : i32
    return %c0_i32, %arg1 : i32, i32
  }
  func.func @transform_2(%arg0: i32, %arg1: i32) -> (i32, i32) {
    %c0_i32 = arith.constant 0 : i32
    %c0_i32_0 = arith.constant 0 : i32
    return %c0_i32, %arg1 : i32, i32
  }
  func.func @transform_3(%arg0: i32, %arg1: i32) -> (i32, i32) {
    %c0_i32 = arith.constant 0 : i32
    %c0_i32_0 = arith.constant 0 : i32
    return %arg1, %c0_i32 : i32, i32
  }
  func.func @transform_4(%arg0: i32, %arg1: i32) -> (i32, i32) {
    %c0_i32 = arith.constant 0 : i32
    %c0_i32_0 = arith.constant 0 : i32
    %c0_i32_1 = arith.constant 0 : i32
    return %c0_i32, %c0_i32_0 : i32, i32
  }
  func.func @transform_5(%arg0: i32, %arg1: i32) -> (i32, i32) {
    %c0_i32 = arith.constant 0 : i32
    %c0_i32_0 = arith.constant 0 : i32
    return %arg0, %c0_i32 : i32, i32
  }
}

</mosaic_0001>

<llo_original>
// kernel: mlp_forward.1
$region0: #{mlp_forward.1}
  #allocation0 [shape = 'u32[]', space=smem, size = 0x4, offset = 0x4, fixed_abs, tag = 'smem constant byte address 0x4 - core index']
  #allocation1 [shape = 'u32[144,128]{1,0:T(1,128)}', space=vmem, size = 0x12000, scoped, tag = 'internal scratch']
  #allocation2 [shape = 'f32[16,128]{1,0:T(8,128)}', space=vmem, size = 0x2000, scoped, tag = 'scratch operand']
  %s0 = inlined_call_operand.hbm [shape: f32[16,128], index: 0, kind: input, shape index: {}]
  %s1 = inlined_call_operand.hbm [shape: f32[128,512], index: 1, kind: input, shape index: {}]
  %s2 = inlined_call_operand.vmem [shape: f32[1,512], index: 2, kind: input, shape index: {}]
  %s3 = inlined_call_operand.hbm [shape: f32[512,128], index: 3, kind: input, shape index: {}]
  %s4 = inlined_call_operand.vmem [shape: f32[1,128], index: 4, kind: input, shape index: {}]
  %s5 = inlined_call_operand.hbm [shape: f32[16,128], index: 5, kind: output, shape index: {}]
  %s6 = sld [smem:[#allocation0]]
  $region50: #{mlp_forward.1} parent=0
    _
  %s8 = ssub.s32 1, %s6
  %s9 = scalar_select 0, %s8, %s6
  $region1: #{mlp_forward.1} parent=0
    #allocation3 [shape = 'u8[8192]{0}', space=vmem, size = 0x2000, scoped, tag = 'input window, operand 0, single buffered']
    #allocation4 [shape = 's32[1]{0}', space=sflag, size = 0x4, scoped, tag = 'scoped memory for mlp_forward.1']
    #allocation5 [shape = 's32[1]{0}', space=sflag, size = 0x4, scoped, tag = 'scoped memory for mlp_forward.1']
    #allocation6 [shape = 'u8[262144]{0}', space=vmem, size = 0x40000, scoped, tag = 'input window, operand 1, single buffered']
    #allocation7 [shape = 's32[1]{0}', space=sflag, size = 0x4, scoped, tag = 'scoped memory for mlp_forward.1']
    #allocation8 [shape = 'u8[262144]{0}', space=vmem, size = 0x40000, scoped, tag = 'input window, operand 3, single buffered']
    #allocation9 [shape = 'u8[8192]{0}', space=vmem, size = 0x2000, scoped, tag = 'output window, operand 0, single buffered']
    %10 = vsyncpa [#allocation4], 0
    %11 = vsyncpa [#allocation7], 0
    %12 = vsyncpa [#allocation5], 0
    // Predicated region
    $region2: #{mlp_forward.1} parent=1 // pred_check
      _
    $region3: #{mlp_forward.1} parent=1 // pred_check_branch
      %14 = sbr.rel (0) target = $region5
    $region4: #{mlp_forward.1} parent=1 // pred_region
      %s16 = ssub.s32 256, 256
      %17 = vsyncadd [#allocation4], %s16
      %s18 = sshll.u32 [#allocation3], 4
      %s19 = int_to_ptr.vmem [resolvable:$true] %s18
      %24 = dma.hbm_to_vmem [thread:$0]  %s0, 256, %s19, [#allocation4], 128, 128, 8
    $region5: #{mlp_forward.1} parent=1 // pred_fallthru
      _
    // Predicated region
    $region6: #{mlp_forward.1} parent=1 // pred_check
      _
    $region7: #{mlp_forward.1} parent=1 // pred_check_branch
      %26 = sbr.rel (0) target = $region9
    $region8: #{mlp_forward.1} parent=1 // pred_region
      %s28 = ssub.s32 8192, 8192
      %29 = vsyncadd [#allocation7], %s28
      %s30 = sshll.u32 [#allocation6], 4
      %s31 = int_to_ptr.vmem [resolvable:$true] %s30
      %36 = dma.hbm_to_vmem [thread:$0]  %s1, 8192, %s31, [#allocation7], 512, 512, 32
    $region9: #{mlp_forward.1} parent=1 // pred_fallthru
      _
    // Predicated region
    $region10: #{mlp_forward.1} parent=1 // pred_check
      _
    $region11: #{mlp_forward.1} parent=1 // pred_check_branch
      %38 = sbr.rel (0) target = $region13
    $region12: #{mlp_forward.1} parent=1 // pred_region
      _
    $region13: #{mlp_forward.1} parent=1 // pred_fallthru
      _
    // Predicated region
    $region14: #{mlp_forward.1} parent=1 // pred_check
      _
    $region15: #{mlp_forward.1} parent=1 // pred_check_branch
      %40 = sbr.rel (0) target = $region17
    $region16: #{mlp_forward.1} parent=1 // pred_region
      %s42 = ssub.s32 8192, 8192
      %43 = vsyncadd [#allocation7], %s42
      %s44 = sshll.u32 [#allocation8], 4
      %s45 = int_to_ptr.vmem [resolvable:$true] %s44
      %50 = dma.hbm_to_vmem [thread:$0]  %s3, 8192, %s45, [#allocation7], 128, 128, 8
    $region17: #{mlp_forward.1} parent=1 // pred_fallthru
      _
    // Predicated region
    $region18: #{mlp_forward.1} parent=1 // pred_check
      _
    $region19: #{mlp_forward.1} parent=1 // pred_check_branch
      %52 = sbr.rel (0) target = $region21
    $region20: #{mlp_forward.1} parent=1 // pred_region
      _
    $region21: #{mlp_forward.1} parent=1 // pred_fallthru
      _
    // Predicated region
    $region22: #{mlp_forward.1} parent=1 // pred_check
      _
    $region23: #{mlp_forward.1} parent=1 // pred_check_branch
      %54 = sbr.rel (0) target = $region25
    $region24: #{mlp_forward.1} parent=1 // pred_region
      %55 = dma.done [#allocation4], 256
    $region25: #{mlp_forward.1} parent=1 // pred_fallthru
      _
    // Predicated region
    $region26: #{mlp_forward.1} parent=1 // pred_check
      _
    $region27: #{mlp_forward.1} parent=1 // pred_check_branch
      %57 = sbr.rel (0) target = $region29
    $region28: #{mlp_forward.1} parent=1 // pred_region
      %58 = dma.done [#allocation7], 8192
    $region29: #{mlp_forward.1} parent=1 // pred_fallthru
      _
    // Predicated region
    $region30: #{mlp_forward.1} parent=1 // pred_check
      _
    $region31: #{mlp_forward.1} parent=1 // pred_check_branch
      %60 = sbr.rel (0) target = $region33
    $region32: #{mlp_forward.1} parent=1 // pred_region
      %61 = dma.done [#allocation7], 8192
    $region33: #{mlp_forward.1} parent=1 // pred_fallthru
      _
    %p62 = scmp.eq.s32.totalorder 0, 0
    // Predicated region
    $region34: #{mlp_forward.1} parent=1 // pred_check
      %p63 = pneg %p62
    $region35: #{mlp_forward.1} parent=1 // pred_check_branch
      %65 = sbr.rel (%p63) target = $region37
    $region36: #{mlp_forward.1} parent=1 // pred_region
      %66 = vst [vmem:[#allocation2] sm:$0xff] 0.0
      %67 = vst [vmem:[#allocation2 + $0x8] sm:$0xff] 0.0
    $region37: #{mlp_forward.1} parent=1 // pred_fallthru
      _
    %v68 = vld [vmem:[#allocation3] sm:$0xff]
    %v69 = vld [vmem:[#allocation3 + $0x8] sm:$0xff]
    %v70 = vld [vmem:[#allocation6] sm:$0xff]
    %v71 = vld [vmem:[#allocation6 + $0x8] sm:$0xff]
    %v72 = vld [vmem:[#allocation6 + $0x10] sm:$0xff]
    %v73 = vld [vmem:[#allocation6 + $0x18] sm:$0xff]
    %v74 = vld [vmem:[#allocation6 + $0x20] sm:$0xff]
    %v75 = vld [vmem:[#allocation6 + $0x28] sm:$0xff]
    %v76 = vld [vmem:[#allocation6 + $0x30] sm:$0xff]
    %v77 = vld [vmem:[#allocation6 + $0x38] sm:$0xff]
    %v78 = vld [vmem:[#allocation6 + $0x40] sm:$0xff]
    %v79 = vld [vmem:[#allocation6 + $0x48] sm:$0xff]
    %v80 = vld [vmem:[#allocation6 + $0x50] sm:$0xff]
    %v81 = vld [vmem:[#allocation6 + $0x58] sm:$0xff]
    %v82 = vld [vmem:[#allocation6 + $0x60] sm:$0xff]
    %v83 = vld [vmem:[#allocation6 + $0x68] sm:$0xff]
    %v84 = vld [vmem:[#allocation6 + $0x70] sm:$0xff]
    %v85 = vld [vmem:[#allocation6 + $0x78] sm:$0xff]
    %v86 = vld [vmem:[#allocation6 + $0x80] sm:$0xff]
    %v87 = vld [vmem:[#allocation6 + $0x88] sm:$0xff]
    %v88 = vld [vmem:[#allocation6 + $0x90] sm:$0xff]
    %v89 = vld [vmem:[#allocation6 + $0x98] sm:$0xff]
    %v90 = vld [vmem:[#allocation6 + $0xa0] sm:$0xff]
    %v91 = vld [vmem:[#allocation6 + $0xa8] sm:$0xff]
    %v92 = vld [vmem:[#allocation6 + $0xb0] sm:$0xff]
    %v93 = vld [vmem:[#allocation6 + $0xb8] sm:$0xff]
    %v94 = vld [vmem:[#allocation6 + $0xc0] sm:$0xff]
    %v95 = vld [vmem:[#allocation6 + $0xc8] sm:$0xff]
    %v96 = vld [vmem:[#allocation6 + $0xd0] sm:$0xff]
    %v97 = vld [vmem:[#allocation6 + $0xd8] sm:$0xff]
    %v98 = vld [vmem:[#allocation6 + $0xe0] sm:$0xff]
    %v99 = vld [vmem:[#allocation6 + $0xe8] sm:$0xff]
    %v100 = vld [vmem:[#allocation6 + $0xf0] sm:$0xff]
    %v101 = vld [vmem:[#allocation6 + $0xf8] sm:$0xff]
    %v102 = vld [vmem:[#allocation6 + $0x100] sm:$0xff]
    %v103 = vld [vmem:[#allocation6 + $0x108] sm:$0xff]
    %v104 = vld [vmem:[#allocation6 + $0x110] sm:$0xff]
    %v105 = vld [vmem:[#allocation6 + $0x118] sm:$0xff]
    %v106 = vld [vmem:[#allocation6 + $0x120] sm:$0xff]
    %v107 = vld [vmem:[#allocation6 + $0x128] sm:$0xff]
    %v108 = vld [vmem:[#allocation6 + $0x130] sm:$0xff]
    %v109 = vld [vmem:[#allocation6 + $0x138] sm:$0xff]
    %v110 = vld [vmem:[#allocation6 + $0x140] sm:$0xff]
    %v111 = vld [vmem:[#allocation6 + $0x148] sm:$0xff]
    %v112 = vld [vmem:[#allocation6 + $0x150] sm:$0xff]
    %v113 = vld [vmem:[#allocation6 + $0x158] sm:$0xff]
    %v114 = vld [vmem:[#allocation6 + $0x160] sm:$0xff]
    %v115 = vld [vmem:[#allocation6 + $0x168] sm:$0xff]
    %v116 = vld [vmem:[#allocation6 + $0x170] sm:$0xff]
    %v117 = vld [vmem:[#allocation6 + $0x178] sm:$0xff]
    %v118 = vld [vmem:[#allocation6 + $0x180] sm:$0xff]
    %v119 = vld [vmem:[#allocation6 + $0x188] sm:$0xff]
    %v120 = vld [vmem:[#allocation6 + $0x190] sm:$0xff]
    %v121 = vld [vmem:[#allocation6 + $0x198] sm:$0xff]
    %v122 = vld [vmem:[#allocation6 + $0x1a0] sm:$0xff]
    %v123 = vld [vmem:[#allocation6 + $0x1a8] sm:$0xff]
    %v124 = vld [vmem:[#allocation6 + $0x1b0] sm:$0xff]
    %v125 = vld [vmem:[#allocation6 + $0x1b8] sm:$0xff]
    %v126 = vld [vmem:[#allocation6 + $0x1c0] sm:$0xff]
    %v127 = vld [vmem:[#allocation6 + $0x1c8] sm:$0xff]
    %v128 = vld [vmem:[#allocation6 + $0x1d0] sm:$0xff]
    %v129 = vld [vmem:[#allocation6 + $0x1d8] sm:$0xff]
    %v130 = vld [vmem:[#allocation6 + $0x1e0] sm:$0xff]
    %v131 = vld [vmem:[#allocation6 + $0x1e8] sm:$0xff]
    %v132 = vld [vmem:[#allocation6 + $0x1f0] sm:$0xff]
    %v133 = vld [vmem:[#allocation6 + $0x1f8] sm:$0xff]
    %v134 = vld [vmem:[#allocation8] sm:$0xff]
    %v135 = vld [vmem:[#allocation8 + $0x8] sm:$0xff]
    %v136 = vld [vmem:[#allocation8 + $0x10] sm:$0xff]
    %v137 = vld [vmem:[#allocation8 + $0x18] sm:$0xff]
    %v138 = vld [vmem:[#allocation8 + $0x20] sm:$0xff]
    %v139 = vld [vmem:[#allocation8 + $0x28] sm:$0xff]
    %v140 = vld [vmem:[#allocation8 + $0x30] sm:$0xff]
    %v141 = vld [vmem:[#allocation8 + $0x38] sm:$0xff]
    %v142 = vld [vmem:[#allocation8 + $0x40] sm:$0xff]
    %v143 = vld [vmem:[#allocation8 + $0x48] sm:$0xff]
    %v144 = vld [vmem:[#allocation8 + $0x50] sm:$0xff]
    %v145 = vld [vmem:[#allocation8 + $0x58] sm:$0xff]
    %v146 = vld [vmem:[#allocation8 + $0x60] sm:$0xff]
    %v147 = vld [vmem:[#allocation8 + $0x68] sm:$0xff]
    %v148 = vld [vmem:[#allocation8 + $0x70] sm:$0xff]
    %v149 = vld [vmem:[#allocation8 + $0x78] sm:$0xff]
    %v150 = vld [vmem:[#allocation8 + $0x80] sm:$0xff]
    %v151 = vld [vmem:[#allocation8 + $0x88] sm:$0xff]
    %v152 = vld [vmem:[#allocation8 + $0x90] sm:$0xff]
    %v153 = vld [vmem:[#allocation8 + $0x98] sm:$0xff]
    %v154 = vld [vmem:[#allocation8 + $0xa0] sm:$0xff]
    %v155 = vld [vmem:[#allocation8 + $0xa8] sm:$0xff]
    %v156 = vld [vmem:[#allocation8 + $0xb0] sm:$0xff]
    %v157 = vld [vmem:[#allocation8 + $0xb8] sm:$0xff]
    %v158 = vld [vmem:[#allocation8 + $0xc0] sm:$0xff]
    %v159 = vld [vmem:[#allocation8 + $0xc8] sm:$0xff]
    %v160 = vld [vmem:[#allocation8 + $0xd0] sm:$0xff]
    %v161 = vld [vmem:[#allocation8 + $0xd8] sm:$0xff]
    %v162 = vld [vmem:[#allocation8 + $0xe0] sm:$0xff]
    %v163 = vld [vmem:[#allocation8 + $0xe8] sm:$0xff]
    %v164 = vld [vmem:[#allocation8 + $0xf0] sm:$0xff]
    %v165 = vld [vmem:[#allocation8 + $0xf8] sm:$0xff]
    %v166 = vld [vmem:[#allocation8 + $0x100] sm:$0xff]
    %v167 = vld [vmem:[#allocation8 + $0x108] sm:$0xff]
    %v168 = vld [vmem:[#allocation8 + $0x110] sm:$0xff]
    %v169 = vld [vmem:[#allocation8 + $0x118] sm:$0xff]
    %v170 = vld [vmem:[#allocation8 + $0x120] sm:$0xff]
    %v171 = vld [vmem:[#allocation8 + $0x128] sm:$0xff]
    %v172 = vld [vmem:[#allocation8 + $0x130] sm:$0xff]
    %v173 = vld [vmem:[#allocation8 + $0x138] sm:$0xff]
    %v174 = vld [vmem:[#allocation8 + $0x140] sm:$0xff]
    %v175 = vld [vmem:[#allocation8 + $0x148] sm:$0xff]
    %v176 = vld [vmem:[#allocation8 + $0x150] sm:$0xff]
    %v177 = vld [vmem:[#allocation8 + $0x158] sm:$0xff]
    %v178 = vld [vmem:[#allocation8 + $0x160] sm:$0xff]
    %v179 = vld [vmem:[#allocation8 + $0x168] sm:$0xff]
    %v180 = vld [vmem:[#allocation8 + $0x170] sm:$0xff]
    %v181 = vld [vmem:[#allocation8 + $0x178] sm:$0xff]
    %v182 = vld [vmem:[#allocation8 + $0x180] sm:$0xff]
    %v183 = vld [vmem:[#allocation8 + $0x188] sm:$0xff]
    %v184 = vld [vmem:[#allocation8 + $0x190] sm:$0xff]
    %v185 = vld [vmem:[#allocation8 + $0x198] sm:$0xff]
    %v186 = vld [vmem:[#allocation8 + $0x1a0] sm:$0xff]
    %v187 = vld [vmem:[#allocation8 + $0x1a8] sm:$0xff]
    %v188 = vld [vmem:[#allocation8 + $0x1b0] sm:$0xff]
    %v189 = vld [vmem:[#allocation8 + $0x1b8] sm:$0xff]
    %v190 = vld [vmem:[#allocation8 + $0x1c0] sm:$0xff]
    %v191 = vld [vmem:[#allocation8 + $0x1c8] sm:$0xff]
    %v192 = vld [vmem:[#allocation8 + $0x1d0] sm:$0xff]
    %v193 = vld [vmem:[#allocation8 + $0x1d8] sm:$0xff]
    %v194 = vld [vmem:[#allocation8 + $0x1e0] sm:$0xff]
    %v195 = vld [vmem:[#allocation8 + $0x1e8] sm:$0xff]
    %v196 = vld [vmem:[#allocation8 + $0x1f0] sm:$0xff]
    %v197 = vld [vmem:[#allocation8 + $0x1f8] sm:$0xff]
    %v198 = vld [vmem:[%s2] sm:$0xf]
    %v200 = vlaneseq
    %v201 = vshrl.u32 %v200, 7
    %v202 = vsub.s32 0, %v201
    %v203 = vrot.slane %v198, %v202
    %v204 = vlaneseq
    %v205 = vshrl.u32 %v204, 7
    %v206 = vsub.s32 1, %v205
    %v207 = vrot.slane %v198, %v206
    %v208 = vlaneseq
    %v209 = vshrl.u32 %v208, 7
    %v210 = vsub.s32 2, %v209
    %v211 = vrot.slane %v198, %v210
    %v212 = vlaneseq
    %v213 = vshrl.u32 %v212, 7
    %v214 = vsub.s32 3, %v213
    %v215 = vrot.slane %v198, %v214
    %220 = vmatprep.subr.mxu0 %v131
    %221 = vmatpush1.msra.mxu0 %v130
    %222 = vmatprep.subr.mxu0 %v127
    %223 = vmatpush1.msra.mxu0 %v126
    %224 = vmatprep.subr.mxu0 %v123
    %225 = vmatpush1.msra.mxu0 %v122
    %226 = vmatprep.subr.mxu0 %v119
    %227 = vmatpush1.msra.mxu0 %v118
    %228 = vmatprep.subr.mxu0 %v115
    %229 = vmatpush1.msra.mxu0 %v114
    %230 = vmatprep.subr.mxu0 %v111
    %231 = vmatpush1.msra.mxu0 %v110
    %232 = vmatprep.subr.mxu0 %v107
    %233 = vmatpush1.msra.mxu0 %v106
    %234 = vmatprep.subr.mxu0 %v103
    %235 = vmatpush1.msra.mxu0 %v102
    %236 = vmatprep.subr.mxu0 %v99
    %237 = vmatpush1.msra.mxu0 %v98
    %238 = vmatprep.subr.mxu0 %v95
    %239 = vmatpush1.msra.mxu0 %v94
    %240 = vmatprep.subr.mxu0 %v91
    %241 = vmatpush1.msra.mxu0 %v90
    %242 = vmatprep.subr.mxu0 %v87
    %243 = vmatpush1.msra.mxu0 %v86
    %244 = vmatprep.subr.mxu0 %v83
    %245 = vmatpush1.msra.mxu0 %v82
    %246 = vmatprep.subr.mxu0 %v79
    %247 = vmatpush1.msra.mxu0 %v78
    %248 = vmatprep.subr.mxu0 %v75
    %249 = vmatpush1.msra.mxu0 %v74
    %250 = vmatprep.subr.mxu0 %v71
    %251 = vmatpush1.msra.mxu0 %v70
    %252 = vmatprep.subr.mxu0 0.0
    %253 = vmatpush2.msra.mxu0 0.0
    %254 = vmatprep.subr.mxu0 0.0
    %255 = vmatpush2.msra.mxu0 0.0
    %256 = vmatprep.subr.mxu0 0.0
    %257 = vmatpush2.msra.mxu0 0.0
    %258 = vmatprep.subr.mxu0 0.0
    %259 = vmatpush2.msra.mxu0 0.0
    %260 = vmatprep.subr.mxu0 0.0
    %261 = vmatpush2.msra.mxu0 0.0
    %262 = vmatprep.subr.mxu0 0.0
    %263 = vmatpush2.msra.mxu0 0.0
    %264 = vmatprep.subr.mxu0 0.0
    %265 = vmatpush2.msra.mxu0 0.0
    %266 = vmatprep.subr.mxu0 0.0
    %267 = vmatpush2.msra.mxu0 0.0
    %268 = vmatprep.subr.mxu0 0.0
    %269 = vmatpush2.msra.mxu0 0.0
    %270 = vmatprep.subr.mxu0 0.0
    %271 = vmatpush2.msra.mxu0 0.0
    %272 = vmatprep.subr.mxu0 0.0
    %273 = vmatpush2.msra.mxu0 0.0
    %274 = vmatprep.subr.mxu0 0.0
    %275 = vmatpush2.msra.mxu0 0.0
    %276 = vmatprep.subr.mxu0 0.0
    %277 = vmatpush2.msra.mxu0 0.0
    %278 = vmatprep.subr.mxu0 0.0
    %279 = vmatpush2.msra.mxu0 0.0
    %280 = vmatprep.subr.mxu0 0.0
    %281 = vmatpush2.msra.mxu0 0.0
    %282 = vmatprep.subr.mxu0 0.0
    %283 = vmatpush2.msra.mxu0 0.0
    %284 = vmatprep.mubr.f32.mxu0 0.0
    %285 = vmatmul.mubr.f32.gmra.mxu0 %v68
    %v286 = vpop.f32.mrf.mxu0
    %v287 = vadd.f32 %v203, %v286
    %v288 = vpop.f32.mrf.mxu0
    %v289 = vadd.f32 %v207, %v288
    %290 = vmatprep.mubr.f32.mxu0 0.0
    %291 = vmatmul.mubr.f32.gmra.mxu0 %v69
    %v292 = vpop.f32.mrf.mxu0
    %v293 = vadd.f32 %v203, %v292
    %v294 = vpop.f32.mrf.mxu0
    %v295 = vadd.f32 %v207, %v294
    %296 = vdwg.mxu0
    %297 = vmatprep.subr.mxu0 %v133
    %298 = vmatpush1.msra.mxu0 %v132
    %299 = vmatprep.subr.mxu0 %v129
    %300 = vmatpush1.msra.mxu0 %v128
    %301 = vmatprep.subr.mxu0 %v125
    %302 = vmatpush1.msra.mxu0 %v124
    %303 = vmatprep.subr.mxu0 %v121
    %304 = vmatpush1.msra.mxu0 %v120
    %305 = vmatprep.subr.mxu0 %v117
    %306 = vmatpush1.msra.mxu0 %v116
    %307 = vmatprep.subr.mxu0 %v113
    %308 = vmatpush1.msra.mxu0 %v112
    %309 = vmatprep.subr.mxu0 %v109
    %310 = vmatpush1.msra.mxu0 %v108
    %311 = vmatprep.subr.mxu0 %v105
    %312 = vmatpush1.msra.mxu0 %v104
    %313 = vmatprep.subr.mxu0 %v101
    %314 = vmatpush1.msra.mxu0 %v100
    %315 = vmatprep.subr.mxu0 %v97
    %316 = vmatpush1.msra.mxu0 %v96
    %317 = vmatprep.subr.mxu0 %v93
    %318 = vmatpush1.msra.mxu0 %v92
    %319 = vmatprep.subr.mxu0 %v89
    %320 = vmatpush1.msra.mxu0 %v88
    %321 = vmatprep.subr.mxu0 %v85
    %322 = vmatpush1.msra.mxu0 %v84
    %323 = vmatprep.subr.mxu0 %v81
    %324 = vmatpush1.msra.mxu0 %v80
    %325 = vmatprep.subr.mxu0 %v77
    %326 = vmatpush1.msra.mxu0 %v76
    %327 = vmatprep.subr.mxu0 %v73
    %328 = vmatpush1.msra.mxu0 %v72
    %329 = vmatprep.subr.mxu0 0.0
    %330 = vmatpush2.msra.mxu0 0.0
    %331 = vmatprep.subr.mxu0 0.0
    %332 = vmatpush2.msra.mxu0 0.0
    %333 = vmatprep.subr.mxu0 0.0
    %334 = vmatpush2.msra.mxu0 0.0
    %335 = vmatprep.subr.mxu0 0.0
    %336 = vmatpush2.msra.mxu0 0.0
    %337 = vmatprep.subr.mxu0 0.0
    %338 = vmatpush2.msra.mxu0 0.0
    %339 = vmatprep.subr.mxu0 0.0
    %340 = vmatpush2.msra.mxu0 0.0
    %341 = vmatprep.subr.mxu0 0.0
    %342 = vmatpush2.msra.mxu0 0.0
    %343 = vmatprep.subr.mxu0 0.0
    %344 = vmatpush2.msra.mxu0 0.0
    %345 = vmatprep.subr.mxu0 0.0
    %346 = vmatpush2.msra.mxu0 0.0
    %347 = vmatprep.subr.mxu0 0.0
    %348 = vmatpush2.msra.mxu0 0.0
    %349 = vmatprep.subr.mxu0 0.0
    %350 = vmatpush2.msra.mxu0 0.0
    %351 = vmatprep.subr.mxu0 0.0
    %352 = vmatpush2.msra.mxu0 0.0
    %353 = vmatprep.subr.mxu0 0.0
    %354 = vmatpush2.msra.mxu0 0.0
    %355 = vmatprep.subr.mxu0 0.0
    %356 = vmatpush2.msra.mxu0 0.0
    %357 = vmatprep.subr.mxu0 0.0
    %358 = vmatpush2.msra.mxu0 0.0
    %359 = vmatprep.subr.mxu0 0.0
    %360 = vmatpush2.msra.mxu0 0.0
    %361 = vmatprep.mubr.f32.mxu0 0.0
    %362 = vmatmul.mubr.f32.gmra.mxu0 %v68
    %v363 = vpop.f32.mrf.mxu0
    %v364 = vadd.f32 %v211, %v363
    %v365 = vpop.f32.mrf.mxu0
    %v366 = vadd.f32 %v215, %v365
    %367 = vmatprep.mubr.f32.mxu0 0.0
    %368 = vmatmul.mubr.f32.gmra.mxu0 %v69
    %v369 = vpop.f32.mrf.mxu0
    %v370 = vadd.f32 %v211, %v369
    %v371 = vpop.f32.mrf.mxu0
    %v372 = vadd.f32 %v215, %v371
    %373 = vdwg.mxu0
    %v374 = vmul.f32 %v287, %v287
    %v375 = vmul.f32 %v289, %v289
    %v376 = vmul.f32 %v364, %v364
    %v377 = vmul.f32 %v366, %v366
    %v378 = vmul.f32 %v293, %v293
    %v379 = vmul.f32 %v295, %v295
    %v380 = vmul.f32 %v370, %v370
    %v381 = vmul.f32 %v372, %v372
    %v382 = vmul.f32 %v287, 0.7978846
    %v383 = vmul.f32 %v289, 0.7978846
    %v384 = vmul.f32 %v364, 0.7978846
    %v385 = vmul.f32 %v366, 0.7978846
    %v386 = vmul.f32 %v293, 0.7978846
    %v387 = vmul.f32 %v295, 0.7978846
    %v388 = vmul.f32 %v370, 0.7978846
    %v389 = vmul.f32 %v372, 0.7978846
    %v390 = vmul.f32 %v374, 0.044715
    %v391 = vmul.f32 %v375, 0.044715
    %v392 = vmul.f32 %v376, 0.044715
    %v393 = vmul.f32 %v377, 0.044715
    %v394 = vmul.f32 %v378, 0.044715
    %v395 = vmul.f32 %v379, 0.044715
    %v396 = vmul.f32 %v380, 0.044715
    %v397 = vmul.f32 %v381, 0.044715
    %v398 = vadd.f32 %v390, 1.0
    %v399 = vadd.f32 %v391, 1.0
    %v400 = vadd.f32 %v392, 1.0
    %v401 = vadd.f32 %v393, 1.0
    %v402 = vadd.f32 %v394, 1.0
    %v403 = vadd.f32 %v395, 1.0
    %v404 = vadd.f32 %v396, 1.0
    %v405 = vadd.f32 %v397, 1.0
    %v406 = vmul.f32 %v382, %v398
    %v407 = vmul.f32 %v383, %v399
    %v408 = vmul.f32 %v384, %v400
    %v409 = vmul.f32 %v385, %v401
    %v410 = vmul.f32 %v386, %v402
    %v411 = vmul.f32 %v387, %v403
    %v412 = vmul.f32 %v388, %v404
    %v413 = vmul.f32 %v389, %v405
    %v414 = vtanh.pop %v406
    %v415 = vtanh.pop %v407
    %v416 = vtanh.pop %v408
    %v417 = vtanh.pop %v409
    %v418 = vtanh.pop %v410
    %v419 = vtanh.pop %v411
    %v420 = vtanh.pop %v412
    %v421 = vtanh.pop %v413
    %v422 = vmul.f32 %v287, 0.5
    %v423 = vmul.f32 %v289, 0.5
    %v424 = vmul.f32 %v364, 0.5
    %v425 = vmul.f32 %v366, 0.5
    %v426 = vmul.f32 %v293, 0.5
    %v427 = vmul.f32 %v295, 0.5
    %v428 = vmul.f32 %v370, 0.5
    %v429 = vmul.f32 %v372, 0.5
    %v430 = vadd.f32 %v414, 1.0
    %v431 = vadd.f32 %v415, 1.0
    %v432 = vadd.f32 %v416, 1.0
    %v433 = vadd.f32 %v417, 1.0
    %v434 = vadd.f32 %v418, 1.0
    %v435 = vadd.f32 %v419, 1.0
    %v436 = vadd.f32 %v420, 1.0
    %v437 = vadd.f32 %v421, 1.0
    %v438 = vmul.f32 %v422, %v430
    %v439 = vmul.f32 %v423, %v431
    %v440 = vmul.f32 %v424, %v432
    %v441 = vmul.f32 %v425, %v433
    %v442 = vmul.f32 %v426, %v434
    %v443 = vmul.f32 %v427, %v435
    %v444 = vmul.f32 %v428, %v436
    %v445 = vmul.f32 %v429, %v437
    %v446 = vld [vmem:[#allocation2] sm:$0xff]
    %v447 = vld [vmem:[#allocation2 + $0x8] sm:$0xff]
    %448 = vmatprep.subr.mxu0 0.0
    %449 = vmatpush1.msra.mxu0 %v149
    %450 = vmatprep.subr.mxu0 0.0
    %451 = vmatpush1.msra.mxu0 %v148
    %452 = vmatprep.subr.mxu0 0.0
    %453 = vmatpush1.msra.mxu0 %v147
    %454 = vmatprep.subr.mxu0 0.0
    %455 = vmatpush1.msra.mxu0 %v146
    %456 = vmatprep.subr.mxu0 0.0
    %457 = vmatpush1.msra.mxu0 %v145
    %458 = vmatprep.subr.mxu0 0.0
    %459 = vmatpush1.msra.mxu0 %v144
    %460 = vmatprep.subr.mxu0 0.0
    %461 = vmatpush1.msra.mxu0 %v143
    %462 = vmatprep.subr.mxu0 0.0
    %463 = vmatpush1.msra.mxu0 %v142
    %464 = vmatprep.subr.mxu0 0.0
    %465 = vmatpush1.msra.mxu0 %v141
    %466 = vmatprep.subr.mxu0 0.0
    %467 = vmatpush1.msra.mxu0 %v140
    %468 = vmatprep.subr.mxu0 0.0
    %469 = vmatpush1.msra.mxu0 %v139
    %470 = vmatprep.subr.mxu0 0.0
    %471 = vmatpush1.msra.mxu0 %v138
    %472 = vmatprep.subr.mxu0 0.0
    %473 = vmatpush1.msra.mxu0 %v137
    %474 = vmatprep.subr.mxu0 0.0
    %475 = vmatpush1.msra.mxu0 %v136
    %476 = vmatprep.subr.mxu0 0.0
    %477 = vmatpush1.msra.mxu0 %v135
    %478 = vmatprep.subr.mxu0 0.0
    %479 = vmatpush1.msra.mxu0 %v134
    %480 = vmatprep.subr.mxu0 0.0
    %481 = vmatpush2.msra.mxu0 %v165
    %482 = vmatprep.subr.mxu0 0.0
    %483 = vmatpush2.msra.mxu0 %v164
    %484 = vmatprep.subr.mxu0 0.0
    %485 = vmatpush2.msra.mxu0 %v163
    %486 = vmatprep.subr.mxu0 0.0
    %487 = vmatpush2.msra.mxu0 %v162
    %488 = vmatprep.subr.mxu0 0.0
    %489 = vmatpush2.msra.mxu0 %v161
    %490 = vmatprep.subr.mxu0 0.0
    %491 = vmatpush2.msra.mxu0 %v160
    %492 = vmatprep.subr.mxu0 0.0
    %493 = vmatpush2.msra.mxu0 %v159
    %494 = vmatprep.subr.mxu0 0.0
    %495 = vmatpush2.msra.mxu0 %v158
    %496 = vmatprep.subr.mxu0 0.0
    %497 = vmatpush2.msra.mxu0 %v157
    %498 = vmatprep.subr.mxu0 0.0
    %499 = vmatpush2.msra.mxu0 %v156
    %500 = vmatprep.subr.mxu0 0.0
    %501 = vmatpush2.msra.mxu0 %v155
    %502 = vmatprep.subr.mxu0 0.0
    %503 = vmatpush2.msra.mxu0 %v154
    %504 = vmatprep.subr.mxu0 0.0
    %505 = vmatpush2.msra.mxu0 %v153
    %506 = vmatprep.subr.mxu0 0.0
    %507 = vmatpush2.msra.mxu0 %v152
    %508 = vmatprep.subr.mxu0 0.0
    %509 = vmatpush2.msra.mxu0 %v151
    %510 = vmatprep.subr.mxu0 0.0
    %511 = vmatpush2.msra.mxu0 %v150
    %512 = vmatprep.mubr.f32.mxu0 %v439
    %513 = vmatmul.mubr.f32.gmra.mxu0 %v438
    %v514 = vpop.f32.mrf.mxu0
    %v515 = vadd.f32 0.0, %v514
    %v516 = vpop.f32.mrf.mxu0
    %517 = vmatprep.mubr.f32.mxu0 %v443
    %518 = vmatmul.mubr.f32.gmra.mxu0 %v442
    %v519 = vpop.f32.mrf.mxu0
    %v520 = vadd.f32 0.0, %v519
    %v521 = vpop.f32.mrf.mxu0
    %522 = vdwg.mxu0
    %523 = vmatprep.subr.mxu0 0.0
    %524 = vmatpush1.msra.mxu0 %v181
    %525 = vmatprep.subr.mxu0 0.0
    %526 = vmatpush1.msra.mxu0 %v180
    %527 = vmatprep.subr.mxu0 0.0
    %528 = vmatpush1.msra.mxu0 %v179
    %529 = vmatprep.subr.mxu0 0.0
    %530 = vmatpush1.msra.mxu0 %v178
    %531 = vmatprep.subr.mxu0 0.0
    %532 = vmatpush1.msra.mxu0 %v177
    %533 = vmatprep.subr.mxu0 0.0
    %534 = vmatpush1.msra.mxu0 %v176
    %535 = vmatprep.subr.mxu0 0.0
    %536 = vmatpush1.msra.mxu0 %v175
    %537 = vmatprep.subr.mxu0 0.0
    %538 = vmatpush1.msra.mxu0 %v174
    %539 = vmatprep.subr.mxu0 0.0
    %540 = vmatpush1.msra.mxu0 %v173
    %541 = vmatprep.subr.mxu0 0.0
    %542 = vmatpush1.msra.mxu0 %v172
    %543 = vmatprep.subr.mxu0 0.0
    %544 = vmatpush1.msra.mxu0 %v171
    %545 = vmatprep.subr.mxu0 0.0
    %546 = vmatpush1.msra.mxu0 %v170
    %547 = vmatprep.subr.mxu0 0.0
    %548 = vmatpush1.msra.mxu0 %v169
    %549 = vmatprep.subr.mxu0 0.0
    %550 = vmatpush1.msra.mxu0 %v168
    %551 = vmatprep.subr.mxu0 0.0
    %552 = vmatpush1.msra.mxu0 %v167
    %553 = vmatprep.subr.mxu0 0.0
    %554 = vmatpush1.msra.mxu0 %v166
    %555 = vmatprep.subr.mxu0 0.0
    %556 = vmatpush2.msra.mxu0 %v197
    %557 = vmatprep.subr.mxu0 0.0
    %558 = vmatpush2.msra.mxu0 %v196
    %559 = vmatprep.subr.mxu0 0.0
    %560 = vmatpush2.msra.mxu0 %v195
    %561 = vmatprep.subr.mxu0 0.0
    %562 = vmatpush2.msra.mxu0 %v194
    %563 = vmatprep.subr.mxu0 0.0
    %564 = vmatpush2.msra.mxu0 %v193
    %565 = vmatprep.subr.mxu0 0.0
    %566 = vmatpush2.msra.mxu0 %v192
    %567 = vmatprep.subr.mxu0 0.0
    %568 = vmatpush2.msra.mxu0 %v191
    %569 = vmatprep.subr.mxu0 0.0
    %570 = vmatpush2.msra.mxu0 %v190
    %571 = vmatprep.subr.mxu0 0.0
    %572 = vmatpush2.msra.mxu0 %v189
    %573 = vmatprep.subr.mxu0 0.0
    %574 = vmatpush2.msra.mxu0 %v188
    %575 = vmatprep.subr.mxu0 0.0
    %576 = vmatpush2.msra.mxu0 %v187
    %577 = vmatprep.subr.mxu0 0.0
    %578 = vmatpush2.msra.mxu0 %v186
    %579 = vmatprep.subr.mxu0 0.0
    %580 = vmatpush2.msra.mxu0 %v185
    %581 = vmatprep.subr.mxu0 0.0
    %582 = vmatpush2.msra.mxu0 %v184
    %583 = vmatprep.subr.mxu0 0.0
    %584 = vmatpush2.msra.mxu0 %v183
    %585 = vmatprep.subr.mxu0 0.0
    %586 = vmatpush2.msra.mxu0 %v182
    %587 = vmatprep.mubr.f32.mxu0 %v441
    %588 = vmatmul.mubr.f32.gmra.mxu0 %v440
    %v589 = vpop.f32.mrf.mxu0
    %v590 = vadd.f32 %v515, %v589
    %v591 = vpop.f32.mrf.mxu0
    %592 = vmatprep.mubr.f32.mxu0 %v445
    %593 = vmatmul.mubr.f32.gmra.mxu0 %v444
    %v594 = vpop.f32.mrf.mxu0
    %v595 = vadd.f32 %v520, %v594
    %v596 = vpop.f32.mrf.mxu0
    %597 = vdwg.mxu0
    %v598 = vadd.f32 %v446, %v590
    %v599 = vadd.f32 %v447, %v595
    %600 = vst [vmem:[#allocation2] sm:$0xff] %v598
    %601 = vst [vmem:[#allocation2 + $0x8] sm:$0xff] %v599
    // Predicated region
    $region38: #{mlp_forward.1} parent=1 // pred_check
      %p602 = pneg %p62
    $region39: #{mlp_forward.1} parent=1 // pred_check_branch
      %604 = sbr.rel (%p602) target = $region41
    $region40: #{mlp_forward.1} parent=1 // pred_region
      %v605 = vld [vmem:[#allocation2] sm:$0xff]
      %v606 = vld [vmem:[#allocation2 + $0x8] sm:$0xff]
      %v607 = vld [vmem:[%s4] sm:$0x1]
      %v609 = vlaneseq
      %v610 = vshrl.u32 %v609, 7
      %v611 = vsub.s32 0, %v610
      %v612 = vrot.slane %v607, %v611
      %v614 = vadd.f32 %v605, %v612
      %v615 = vadd.f32 %v606, %v612
      %616 = vst [vmem:[#allocation9] sm:$0xff] %v614
      %617 = vst [vmem:[#allocation9 + $0x8] sm:$0xff] %v615
    $region41: #{mlp_forward.1} parent=1 // pred_fallthru
      _
    // Predicated region
    $region42: #{mlp_forward.1} parent=1 // pred_check
      _
    $region43: #{mlp_forward.1} parent=1 // pred_check_branch
      %619 = sbr.rel (0) target = $region45
    $region44: #{mlp_forward.1} parent=1 // pred_region
      %s621 = ssub.s32 256, 256
      %622 = vsyncadd [#allocation5], %s621
      %s623 = sshll.u32 [#allocation9], 4
      %s624 = int_to_ptr.vmem [resolvable:$true] %s623
      %629 = dma.vmem_to_hbm [thread:$0]  %s624, 256, %s5, [#allocation5], 128, 128, 8
    $region45: #{mlp_forward.1} parent=1 // pred_fallthru
      _
    // Predicated region
    $region46: #{mlp_forward.1} parent=1 // pred_check
      _
    $region47: #{mlp_forward.1} parent=1 // pred_check_branch
      %631 = sbr.rel (0) target = $region49
    $region48: #{mlp_forward.1} parent=1 // pred_region
      %632 = dma.done [#allocation5], 256
    $region49: #{mlp_forward.1} parent=1 // pred_fallthru
      _
    %633 = vsyncpa [#allocation4], 1
    %634 = vsyncpa [#allocation7], 1
    %635 = vsyncpa [#allocation5], 1

</llo_original>
